<compile_context>
chip_gen: v7x
topology: tpu7x:2x2x1
jax: 0.10.0
libtpu: 0.0.40
codegen_flags: <defaults>
</compile_context>

<pallas_src>
import functools
from dataclasses import dataclass

import numpy as np
import jax
import jax.numpy as jnp
from jax.experimental import pallas as pl
from jax.experimental.pallas import tpu as pltpu

LANE = 128
TILE_ROWS_MAX = 2048          # 2048 * 128 * 4 B = 1 MiB per f32 buffer
EPS = 1e-8


@dataclass
class OptimizerConfig:
    """Configuration for the dropout rate optimization process."""
    max_iterations: int = 30
    learning_rate: float = 0.1
    decay_rate: float = 0.9
    stopping_error: float = 0.01


# ----------------------------------------------------------------------------
# In-kernel helpers
# ----------------------------------------------------------------------------
def _uniform24(shape, seed, row_offset):
    """Counter-based PRNG: 24-bit uniform ints per element, independent of tiling.

    murmur3-style integer mix of (global element index, seed) so every grid tile
    draws an independent mask and results do not change with the tile size.
    """
    r = jax.lax.broadcasted_iota(jnp.int32, shape, 0)
    c = jax.lax.broadcasted_iota(jnp.int32, shape, 1)
    gidx = (row_offset + r) * shape[1] + c
    h = gidx.astype(jnp.uint32) + seed.astype(jnp.uint32) * jnp.uint32(0x9E3779B9)
    h = h ^ (h >> 16)
    h = h * jnp.uint32(0x85EBCA6B)
    h = h ^ (h >> 13)
    h = h * jnp.uint32(0xC2B2AE35)
    h = h ^ (h >> 16)
    return (h >> 8).astype(jnp.int32)            # uniform in [0, 2^24)


def _dropout_tile(x_f32, rate, seed, row_offset):
    """Inverted dropout on one tile (integer-threshold Bernoulli test)."""
    u24 = _uniform24(x_f32.shape, seed, row_offset)
    thresh = (jnp.clip(rate, 0.0, 1.0) * jnp.float32(16777216.0)).astype(jnp.int32)
    keep = u24 >= thresh                          # P(keep) = 1 - rate
    scale = jnp.where(rate < 1.0, 1.0 / jnp.maximum(1.0 - rate, 1e-12), 0.0)
    return jnp.where(keep, x_f32 * scale, 0.0)


# ----------------------------------------------------------------------------
# Kernels
# ----------------------------------------------------------------------------
def _loss_kernel(rate_ref, seed_ref, x_ref, num_ref, den_ref):
    """Loss-only pass: accumulate sum((pre-post)^2) and sum(pre^2) over row tiles."""
    i = pl.program_id(0)

    @pl.when(i == 0)
    def _():
        num_ref[...] = jnp.zeros_like(num_ref)
        den_ref[...] = jnp.zeros_like(den_ref)

    x = x_ref[...].astype(jnp.float32)
    post = _dropout_tile(x, rate_ref[0], seed_ref[0], i * x_ref.shape[0])
    diff = x - post
    num_ref[...] += jnp.sum(diff * diff)
    den_ref[...] += jnp.sum(x * x)


def _apply_kernel(rate_ref, seed_ref, x_ref, o_ref):
    """Dropout application pass (writes the post-dropout tensor)."""
    i = pl.program_id(0)
    x = x_ref[...].astype(jnp.float32)
    post = _dropout_tile(x, rate_ref[0], seed_ref[0], i * x_ref.shape[0])
    o_ref[...] = post.astype(o_ref.dtype)


# ----------------------------------------------------------------------------
# pallas_call wrappers
# ----------------------------------------------------------------------------
def _smem_spec():
    return pl.BlockSpec(memory_space=pltpu.MemorySpace.SMEM)


def _info_loss_2d(x2d, rate, seed, tile_rows):
    """info_loss = sum((pre-post)^2) / (sum(pre^2) + eps), row-tiled reduction."""
    rows, lanes = x2d.shape
    num, den = pl.pallas_call(
        _loss_kernel,
        out_shape=(jax.ShapeDtypeStruct((1, 1), jnp.float32),
                   jax.ShapeDtypeStruct((1, 1), jnp.float32)),
        grid=(rows // tile_rows,),
        in_specs=[_smem_spec(), _smem_spec(),
                  pl.BlockSpec((tile_rows, lanes), lambda i: (i, 0))],
        out_specs=(pl.BlockSpec((1, 1), lambda i: (0, 0)),
                   pl.BlockSpec((1, 1), lambda i: (0, 0))),
        compiler_params=pltpu.CompilerParams(dimension_semantics=("arbitrary",)),
    )(rate.reshape(1).astype(jnp.float32), seed.reshape(1).astype(jnp.int32), x2d)
    return num[0, 0] / (den[0, 0] + jnp.float32(EPS))


@functools.partial(jax.jit, static_argnames=("tile_rows",))
def _apply_dropout_2d(x2d, rate, seed, *, tile_rows):
    rows, lanes = x2d.shape
    return pl.pallas_call(
        _apply_kernel,
        out_shape=jax.ShapeDtypeStruct((rows, lanes), x2d.dtype),
        grid=(rows // tile_rows,),
        in_specs=[_smem_spec(), _smem_spec(),
                  pl.BlockSpec((tile_rows, lanes), lambda i: (i, 0))],
        out_specs=pl.BlockSpec((tile_rows, lanes), lambda i: (i, 0)),
        compiler_params=pltpu.CompilerParams(dimension_semantics=("parallel",)),
    )(rate.reshape(1).astype(jnp.float32), seed.reshape(1).astype(jnp.int32), x2d)


@functools.partial(jax.jit, static_argnames=("tile_rows", "threshold", "max_iterations",
                                             "learning_rate", "decay_rate",
                                             "stopping_error"))
def _optimize_rate(x2d, p0, seed0, *, tile_rows, threshold, max_iterations,
                   learning_rate, decay_rate, stopping_error):
    """On-device rate search (mirrors _optimize_dropout_rate), no host round trips."""
    def cond(carry):
        i, _p, _loss, done = carry
        return jnp.logical_and(i < max_iterations, jnp.logical_not(done))

    def body(carry):
        i, p, _loss, _done = carry
        current_rate = jnp.clip(p, 0.0, 1.0)
        info_loss = _info_loss_2d(x2d, current_rate, seed0 + i, tile_rows)
        error = info_loss - threshold
        current_lr = jnp.where(i % 10 == 0, learning_rate * decay_rate, learning_rate)
        updated = current_rate - current_lr / (1.0 + jnp.abs(error)) * error
        p_new = jnp.clip(updated, 0.0, 1.0).astype(jnp.float32)
        done = jnp.abs(error) < stopping_error          # break after the update
        return i + 1, p_new, info_loss, done

    carry0 = (jnp.int32(0), p0.astype(jnp.float32), jnp.float32(0.0), jnp.bool_(False))
    _, p_final, last_loss, _ = jax.lax.while_loop(cond, body, carry0)
    return jnp.clip(p_final, 0.0, 1.0), last_loss


# ----------------------------------------------------------------------------
# Module-equivalent wrapper
# ----------------------------------------------------------------------------
class AdaptiveInformationDropoutPallas:
    """Pallas/TPU port of AdaptiveInformationDropout."""

    def __init__(self, initial_p, calc_information_loss=None,
                 information_loss_threshold=0.01, optimizer_config=None,
                 name="", verbose=0, seed=0, **kwargs):
        if not 0 <= initial_p <= 1:
            raise ValueError("Initial dropout probability must be between 0 and 1")
        # TODO(synk): arbitrary host-side `calc_information_loss` callables cannot be
        # fused into a TPU kernel; the relative squared error
        # sum((pre-post)^2) / (sum(pre^2) + eps) is compiled in instead.
        self.p = float(initial_p)                       # non-trainable parameter
        self.information_loss_threshold = float(information_loss_threshold)
        self.optimizer_config = optimizer_config or OptimizerConfig()
        self.name = name
        self.verbose = verbose
        self.additional_properties = kwargs.get("properties", {})
        self.training = True
        self._seed = int(seed)

    @staticmethod
    def _flatten_pad(x):
        """Flatten to a lane-dense (rows, 128) slab, zero-padded so tiles divide it."""
        flat = x.reshape(-1)
        n = flat.shape[0]
        sub = 8 if flat.dtype.itemsize >= 4 else 16     # (8,128) f32 / (16,128) packed
        rows = -(-n // LANE)
        rows = -(-rows // sub) * sub
        tile_rows = min(TILE_ROWS_MAX, rows)
        rows = -(-rows // tile_rows) * tile_rows
        pad = rows * LANE - n
        if pad:
            flat = jnp.pad(flat, (0, pad))              # zeros contribute 0 to num & den
        return flat.reshape(rows, LANE), n, tile_rows

    def forward(self, x):
        if not self.training:
            return x
        cfg = self.optimizer_config
        x2d, n, tile_rows = self._flatten_pad(x)

        rate_final, last_loss = _optimize_rate(
            x2d,
            jnp.float32(np.clip(self.p, 0.0, 1.0)),
            jnp.int32(self._seed),
            tile_rows=tile_rows,
            threshold=self.information_loss_threshold,
            max_iterations=cfg.max_iterations,
            learning_rate=cfg.learning_rate,
            decay_rate=cfg.decay_rate,
            stopping_error=cfg.stopping_error,
        )
        # Dispatch the tiled, pipelined dropout application before syncing the rate
        # back to the host -- only one device round trip per forward.
        post2d = _apply_dropout_2d(x2d, rate_final,
                                   jnp.int32(self._seed + 1_000_003),
                                   tile_rows=tile_rows)
        self.p = float(jax.device_get(rate_final))      # persist parameter (like p.data)
        if self.verbose >= 1:
            print(f"{self.name}: Final Dropout Rate: {100 * self.p:.1f}% | "
                  f"Loss: {float(jax.device_get(last_loss)):.3f}\n")
        # TODO(synk): per-iteration (verbose>=2) logging is not emitted because the
        # rate-search loop runs entirely on device (lax.while_loop) for performance.
        self._seed += cfg.max_iterations + 7            # fresh mask stream next call
        return post2d.reshape(-1)[:n].reshape(x.shape)

    __call__ = forward


if __name__ == "__main__":
    key = jax.random.PRNGKey(0)
    # NCHW, small shapes: batch=2, channels=4, spatial=16x16
    x = jax.random.normal(key, (2, 4, 16, 16), dtype=jnp.float32)

    layer = AdaptiveInformationDropoutPallas(
        initial_p=0.5,
        information_loss_threshold=0.1,
        optimizer_config=OptimizerConfig(),
        name="adaptive_dropout",
        verbose=0,
        seed=0,
    )

    # training-mode forward: optimizes rate on device, then applies dropout
    y_train = jax.block_until_ready(layer(x))
    assert y_train.shape == x.shape and y_train.dtype == x.dtype
    assert bool(jnp.all(jnp.isfinite(y_train)))

    # inverted-dropout check: kept elements scaled by exactly 1/(1-p), dropped are 0
    y_np = np.asarray(y_train)
    x_np = np.asarray(x)
    kept = y_np != 0.0
    if layer.p < 1.0 and kept.any():
        np.testing.assert_allclose(y_np[kept], x_np[kept] / (1.0 - layer.p),
                                   rtol=1e-4, atol=1e-5)

    # eval-mode forward is identity (as in the PyTorch module)
    layer.training = False
    y_eval = jax.block_until_ready(layer(x))
    assert bool(jnp.all(y_eval == x))

    print("KERNEL_OK")
</pallas_src>

<mosaic_0001>
module attributes {stable_mosaic.version = 11 : i64} {
  func.func @_loss_kernel(%arg0: i32, %arg1: memref<1xf32, #tpu.memory_space<smem>>, %arg2: memref<1xi32, #tpu.memory_space<smem>>, %arg3: memref<16x128xf32, #tpu.memory_space<vmem>>, %arg4: memref<1x1xf32, #tpu.memory_space<vmem>>, %arg5: memref<1x1xf32, #tpu.memory_space<vmem>>) attributes {dimension_semantics = [#tpu.dimension_semantics<arbitrary>], iteration_bounds = array<i64: 1>, scalar_prefetch = 0 : i64, scratch_operands = 0 : i64, tpu.core_type = #tpu.core_type<tc>, window_params = [{transform_indices = @transform_0, window_bounds = array<i64: 1>}, {transform_indices = @transform_1, window_bounds = array<i64: 1>}, {transform_indices = @transform_2, window_bounds = array<i64: 16, 128>}, {pipeline_mode = #tpu.pipeline_mode<synchronous>, transform_indices = @transform_3, window_bounds = array<i64: 1, 1>}, {pipeline_mode = #tpu.pipeline_mode<synchronous>, transform_indices = @transform_4, window_bounds = array<i64: 1, 1>}]} {
    %c0_i32 = arith.constant 0 : i32
    %0 = arith.cmpi eq, %arg0, %c0_i32 : i32
    %1 = arith.extui %0 : i1 to i32
    %c0_i32_0 = arith.constant 0 : i32
    %2 = arith.cmpi ne, %1, %c0_i32_0 : i32
    scf.if %2 {
      %cst_24 = arith.constant 0.000000e+00 : f32
      %66 = vector.broadcast %cst_24 : f32 to vector<1x1xf32>
      %c0_25 = arith.constant 0 : index
      %c0_26 = arith.constant 0 : index
      %67 = vector.load %arg4[%c0_25, %c0_26] : memref<1x1xf32, #tpu.memory_space<vmem>>, vector<1x1xf32>
      tpu.vector_store %arg4[%c0_25, %c0_26], %66 {strides = array<i32>} : memref<1x1xf32, #tpu.memory_space<vmem>>, vector<1x1xf32>,
      %cst_27 = arith.constant 0.000000e+00 : f32
      %68 = vector.broadcast %cst_27 : f32 to vector<1x1xf32>
      %c0_28 = arith.constant 0 : index
      %c0_29 = arith.constant 0 : index
      %69 = vector.load %arg5[%c0_28, %c0_29] : memref<1x1xf32, #tpu.memory_space<vmem>>, vector<1x1xf32>
      tpu.vector_store %arg5[%c0_28, %c0_29], %68 {strides = array<i32>} : memref<1x1xf32, #tpu.memory_space<vmem>>, vector<1x1xf32>,
    } else {
    }
    %c0 = arith.constant 0 : index
    %c0_1 = arith.constant 0 : index
    %3 = vector.load %arg3[%c0, %c0_1] : memref<16x128xf32, #tpu.memory_space<vmem>>, vector<16x128xf32>
    %c0_2 = arith.constant 0 : index
    %4 = memref.load %arg1[%c0_2] : memref<1xf32, #tpu.memory_space<smem>>
    %c0_3 = arith.constant 0 : index
    %5 = memref.load %arg2[%c0_3] : memref<1xi32, #tpu.memory_space<smem>>
    %c16_i32 = arith.constant 16 : i32
    %6 = arith.muli %arg0, %c16_i32 : i32
    %7 = tpu.iota {dimensions = array<i32: 0>} : vector<16x128xi32>
    %8 = tpu.iota {dimensions = array<i32: 1>} : vector<16x128xi32>
    %9 = vector.broadcast %6 : i32 to vector<16x128xi32>
    %10 = arith.addi %9, %7 : vector<16x128xi32>
    %c128_i32 = arith.constant 128 : i32
    %11 = vector.broadcast %c128_i32 : i32 to vector<16x128xi32>
    %12 = arith.muli %10, %11 : vector<16x128xi32>
    %13 = arith.addi %12, %8 : vector<16x128xi32>
    %c-1640531527_i32 = arith.constant -1640531527 : i32
    %14 = arith.muli %5, %c-1640531527_i32 : i32
    %15 = vector.broadcast %14 : i32 to vector<16x128xi32>
    %16 = arith.addi %13, %15 : vector<16x128xi32>
    %c16_i32_4 = arith.constant 16 : i32
    %17 = vector.broadcast %c16_i32_4 : i32 to vector<16x128xi32>
    %18 = arith.shrui %16, %17 : vector<16x128xi32>
    %19 = arith.xori %16, %18 : vector<16x128xi32>
    %c-2048144789_i32 = arith.constant -2048144789 : i32
    %20 = vector.broadcast %c-2048144789_i32 : i32 to vector<16x128xi32>
    %21 = arith.muli %19, %20 : vector<16x128xi32>
    %c13_i32 = arith.constant 13 : i32
    %22 = vector.broadcast %c13_i32 : i32 to vector<16x128xi32>
    %23 = arith.shrui %21, %22 : vector<16x128xi32>
    %24 = arith.xori %21, %23 : vector<16x128xi32>
    %c-1028477387_i32 = arith.constant -1028477387 : i32
    %25 = vector.broadcast %c-1028477387_i32 : i32 to vector<16x128xi32>
    %26 = arith.muli %24, %25 : vector<16x128xi32>
    %c16_i32_5 = arith.constant 16 : i32
    %27 = vector.broadcast %c16_i32_5 : i32 to vector<16x128xi32>
    %28 = arith.shrui %26, %27 : vector<16x128xi32>
    %29 = arith.xori %26, %28 : vector<16x128xi32>
    %c8_i32 = arith.constant 8 : i32
    %30 = vector.broadcast %c8_i32 : i32 to vector<16x128xi32>
    %31 = arith.shrui %29, %30 : vector<16x128xi32>
    %cst = arith.constant 0.000000e+00 : f32
    %cst_6 = arith.constant 1.000000e+00 : f32
    %32 = arith.maximumf %cst, %4 : f32
    %33 = arith.minimumf %cst_6, %32 : f32
    %cst_7 = arith.constant 0x4B800000 : f32
    %34 = arith.mulf %33, %cst_7 : f32
    %35 = arith.fptosi %34 : f32 to i32
    %36 = vector.broadcast %35 : i32 to vector<16x128xi32>
    %37 = arith.cmpi sge, %31, %36 : vector<16x128xi32>
    %cst_8 = arith.constant 1.000000e+00 : f32
    %38 = arith.cmpf olt, %4, %cst_8 : f32
    %cst_9 = arith.constant 1.000000e+00 : f32
    %39 = arith.subf %cst_9, %4 : f32
    %cst_10 = arith.constant 9.99999996E-13 : f32
    %40 = arith.maximumf %39, %cst_10 : f32
    %cst_11 = arith.constant 1.000000e+00 : f32
    %41 = arith.divf %cst_11, %40 : f32
    %cst_12 = arith.constant 0.000000e+00 : f32
    %42 = arith.select %38, %41, %cst_12 : f32
    %43 = vector.broadcast %42 : f32 to vector<16x128xf32>
    %44 = arith.mulf %3, %43 : vector<16x128xf32>
    %cst_13 = arith.constant 0.000000e+00 : f32
    %45 = vector.broadcast %cst_13 : f32 to vector<16x128xf32>
    %46 = arith.select %37, %44, %45 : vector<16x128xi1>, vector<16x128xf32>
    %47 = arith.subf %3, %46 : vector<16x128xf32>
    %c0_14 = arith.constant 0 : index
    %c0_15 = arith.constant 0 : index
    %48 = vector.load %arg4[%c0_14, %c0_15] : memref<1x1xf32, #tpu.memory_space<vmem>>, vector<1x1xf32>
    %49 = arith.mulf %47, %47 : vector<16x128xf32>
    %50 = vector.shape_cast %49 : vector<16x128xf32> to vector<1x16x128xf32>
    %cst_16 = arith.constant dense<0.000000e+00> : vector<1xf32>
    %51 = vector.multi_reduction <add>, %50, %cst_16 [1, 2] : vector<1x16x128xf32> to vector<1xf32>
    %52 = vector.shape_cast %51 : vector<1xf32> to vector<1x1x1xf32>
    %53 = vector.extract %52[0, 0, 0] : f32 from vector<1x1x1xf32>
    %54 = vector.broadcast %53 : f32 to vector<1x1xf32>
    %55 = arith.addf %48, %54 : vector<1x1xf32>
    %c0_17 = arith.constant 0 : index
    %c0_18 = arith.constant 0 : index
    %56 = vector.load %arg4[%c0_17, %c0_18] : memref<1x1xf32, #tpu.memory_space<vmem>>, vector<1x1xf32>
    tpu.vector_store %arg4[%c0_17, %c0_18], %55 {strides = array<i32>} : memref<1x1xf32, #tpu.memory_space<vmem>>, vector<1x1xf32>,
    %c0_19 = arith.constant 0 : index
    %c0_20 = arith.constant 0 : index
    %57 = vector.load %arg5[%c0_19, %c0_20] : memref<1x1xf32, #tpu.memory_space<vmem>>, vector<1x1xf32>
    %58 = arith.mulf %3, %3 : vector<16x128xf32>
    %59 = vector.shape_cast %58 : vector<16x128xf32> to vector<1x16x128xf32>
    %cst_21 = arith.constant dense<0.000000e+00> : vector<1xf32>
    %60 = vector.multi_reduction <add>, %59, %cst_21 [1, 2] : vector<1x16x128xf32> to vector<1xf32>
    %61 = vector.shape_cast %60 : vector<1xf32> to vector<1x1x1xf32>
    %62 = vector.extract %61[0, 0, 0] : f32 from vector<1x1x1xf32>
    %63 = vector.broadcast %62 : f32 to vector<1x1xf32>
    %64 = arith.addf %57, %63 : vector<1x1xf32>
    %c0_22 = arith.constant 0 : index
    %c0_23 = arith.constant 0 : index
    %65 = vector.load %arg5[%c0_22, %c0_23] : memref<1x1xf32, #tpu.memory_space<vmem>>, vector<1x1xf32>
    tpu.vector_store %arg5[%c0_22, %c0_23], %64 {strides = array<i32>} : memref<1x1xf32, #tpu.memory_space<vmem>>, vector<1x1xf32>,
    return
  }
  func.func @transform_0(%arg0: i32) -> i32 {
    %c0_i32 = arith.constant 0 : i32
    %c0_i32_0 = arith.constant 0 : i32
    return %c0_i32 : i32
  }
  func.func @transform_1(%arg0: i32) -> i32 {
    %c0_i32 = arith.constant 0 : i32
    %c0_i32_0 = arith.constant 0 : i32
    return %c0_i32 : i32
  }
  func.func @transform_2(%arg0: i32) -> (i32, i32) {
    %c0_i32 = arith.constant 0 : i32
    %c0_i32_0 = arith.constant 0 : i32
    return %arg0, %c0_i32 : i32, i32
  }
  func.func @transform_3(%arg0: i32) -> (i32, i32) {
    %c0_i32 = arith.constant 0 : i32
    %c0_i32_0 = arith.constant 0 : i32
    %c0_i32_1 = arith.constant 0 : i32
    return %c0_i32, %c0_i32_0 : i32, i32
  }
  func.func @transform_4(%arg0: i32) -> (i32, i32) {
    %c0_i32 = arith.constant 0 : i32
    %c0_i32_0 = arith.constant 0 : i32
    %c0_i32_1 = arith.constant 0 : i32
    return %c0_i32, %c0_i32_0 : i32, i32
  }
}

</mosaic_0001>

<llo_original>
// kernel: body.6
$region0: #{body.6}
  #allocation0 [shape = 'u32[]', space=smem, size = 0x4, offset = 0x4, fixed_abs, tag = 'smem constant byte address 0x4 - core index']
  #allocation1 [shape = 'u32[144,128]{1,0:T(1,128)}', space=vmem, size = 0x12000, scoped, tag = 'internal scratch']
  #allocation2 [shape = 'f32[1]{0:T(128)S(6)}', space=smem, size = 0x200, scoped, tag = 'scoped memory for body.6']
  #allocation3 [shape = 's32[1]{0:T(128)S(6)}', space=smem, size = 0x200, scoped, tag = 'scoped memory for body.6']
  %s0 = inlined_call_operand.<no memory space> [shape: f32[1], index: 0, kind: input, shape index: {}]
  %s1 = inlined_call_operand.<no memory space> [shape: s32[1], index: 1, kind: input, shape index: {}]
  %s2 = inlined_call_operand.vmem [shape: f32[16,128], index: 2, kind: input, shape index: {}]
  %s3 = inlined_call_operand.hbm [shape: f32[1,1], index: 3, kind: output, shape index: {0}]
  %s4 = inlined_call_operand.hbm [shape: f32[1,1], index: 4, kind: output, shape index: {1}]
  %5 = xla_tuple %s3, %s4
  %s6 = sld [smem:[#allocation0]]
  $region34: #{body.6} parent=0
    _
  %s8 = ssub.s32 1, %s6
  %s9 = scalar_select 0, %s8, %s6
  %10 = sst [smem:[#allocation2]] %s0
  %11 = sst [smem:[#allocation3]] %s1
  $region1: #{body.6} parent=0
    #allocation4 [shape = 'u8[512]{0}', space=vmem, size = 0x400, scoped, tag = 'output window, operand 0, single buffered']
    #allocation5 [shape = 's32[1]{0}', space=sflag, size = 0x4, scoped, tag = 'scoped memory for body.6']
    #allocation6 [shape = 'u8[512]{0}', space=vmem, size = 0x400, scoped, tag = 'output window, operand 1, single buffered']
    #allocation7 [shape = 's32[1]{0}', space=sflag, size = 0x4, scoped, tag = 'scoped memory for body.6']
    %12 = vsyncpa [#allocation5], 0
    %13 = vsyncpa [#allocation7], 0
    // Predicated region
    $region2: #{body.6} parent=1 // pred_check
      _
    $region3: #{body.6} parent=1 // pred_check_branch
      %15 = sbr.rel (0) target = $region5
    $region4: #{body.6} parent=1 // pred_region
      _
    $region5: #{body.6} parent=1 // pred_fallthru
      _
    // Predicated region
    $region6: #{body.6} parent=1 // pred_check
      _
    $region7: #{body.6} parent=1 // pred_check_branch
      %17 = sbr.rel (0) target = $region9
    $region8: #{body.6} parent=1 // pred_region
      _
    $region9: #{body.6} parent=1 // pred_fallthru
      _
    // Predicated region
    $region10: #{body.6} parent=1 // pred_check
      _
    $region11: #{body.6} parent=1 // pred_check_branch
      %19 = sbr.rel (0) target = $region13
    $region12: #{body.6} parent=1 // pred_region
      _
    $region13: #{body.6} parent=1 // pred_fallthru
      _
    %p20 = scmp.eq.s32.totalorder 0, 0
    // Predicated region
    $region14: #{body.6} parent=1 // pred_check
      %p21 = pneg %p20
    $region15: #{body.6} parent=1 // pred_check_branch
      %23 = sbr.rel (%p21) target = $region17
    $region16: #{body.6} parent=1 // pred_region
      %vm24 = vcmask 0
      %25 = vst.msk [vmem:[#allocation4] sm:$0x1] %vm24, 0.0
      %26 = vst.msk [vmem:[#allocation6] sm:$0x1] %vm24, 0.0
    $region17: #{body.6} parent=1 // pred_fallthru
      _
    %v27 = vld [vmem:[%s2] sm:$0xff]
    %v28 = vld [vmem:[%s2 + $0x8] sm:$0xff]
    %s29 = sld [smem:[#allocation2]]
    %s30 = sld [smem:[#allocation3]]
    %s31 = smul.u32 0, 16
    %v32 = vlaneseq
    %v33 = vshrl.u32 %v32, 7
    %v34 = vadd.s32 %v33, 8
    %v35 = vlaneseq
    %v36 = vand.u32 %v35, 127
    %v37 = vstv %s31
    %v38 = vadd.s32 %v37, %v33
    %v39 = vadd.s32 %v37, %v34
    %v40 = vmul.u32 %v38, 128
    %v41 = vmul.u32 %v39, 128
    %v42 = vadd.s32 %v40, %v36
    %v43 = vadd.s32 %v41, %v36
    %s44 = smul.u32 %s30, 2654435769
    %v45 = vstv %s44
    %v46 = vadd.s32 %v42, %v45
    %v47 = vadd.s32 %v43, %v45
    %v48 = vshrl.u32 %v46, 16
    %v49 = vshrl.u32 %v47, 16
    %v50 = vxor.u32 %v46, %v48
    %v51 = vxor.u32 %v47, %v49
    %v52 = vmul.u32 %v50, 2246822507
    %v53 = vmul.u32 %v51, 2246822507
    %v54 = vshrl.u32 %v52, 13
    %v55 = vshrl.u32 %v53, 13
    %v56 = vxor.u32 %v52, %v54
    %v57 = vxor.u32 %v53, %v55
    %v58 = vmul.u32 %v56, 3266489909
    %v59 = vmul.u32 %v57, 3266489909
    %v60 = vshrl.u32 %v58, 16
    %v61 = vshrl.u32 %v59, 16
    %v62 = vxor.u32 %v58, %v60
    %v63 = vxor.u32 %v59, %v61
    %v64 = vshrl.u32 %v62, 8
    %v65 = vshrl.u32 %v63, 8
    %s66 = smax.f32 %s29, 0.0
    %s67 = smin.f32 %s66, 1.0
    %s68 = smul.f32 %s67, 16777216.0
    %s69 = scvt.f32.s32.to.zero.pseudo %s68
    %v70 = vstv %s69
    %vm71 = vcmp.ge.s32.totalorder %v64, %v70
    %vm72 = vcmp.ge.s32.totalorder %v65, %v70
    %p73 = scmp.lt.f32.partialorder %s29, 1.0
    %s74 = ssub.f32 1.0, %s29
    %s75 = smax.f32 %s74, 1e-12
    %v76 = vstv %s75
    %v77 = vrcp.pop %v76
    %s78 = vtos %v77
    %s79 = scalar_select %p73, %s78, 0.0
    %v80 = vstv %s79
    %v81 = vmul.f32 %v27, %v80
    %v82 = vmul.f32 %v28, %v80
    %v83 = vsel %vm71, %v81, 0.0
    %v84 = vsel %vm72, %v82, 0.0
    %v85 = vsub.f32 %v27, %v83
    %v86 = vsub.f32 %v28, %v84
    %v87 = vld [vmem:[#allocation4] sm:$0x1]
    %v88 = vmul.f32 %v85, %v85
    %v89 = vmul.f32 %v86, %v86
    %v90 = vadd.f32 %v88, %v89
    %91 = vadd.xlane.f32.xlu0 %v90
    %v92 = vpop.xlane.xlu0 %91
    %v93 = vrot.slane %v92, 4
    %v94 = vadd.f32 %v92, %v93
    %v95 = vrot.slane %v94, 2
    %v96 = vadd.f32 %v94, %v95
    %v97 = vrot.slane %v96, 1
    %v98 = vadd.f32 %v96, %v97
    %s99 = vtos %v98
    %v100 = vstv %s99
    %v101 = vadd.f32 %v87, %v100
    %vm102 = vcmask 0
    %103 = vst.msk [vmem:[#allocation4] sm:$0x1] %vm102, %v101
    %v104 = vld [vmem:[#allocation6] sm:$0x1]
    %v105 = vmul.f32 %v27, %v27
    %v106 = vmul.f32 %v28, %v28
    %v107 = vadd.f32 %v105, %v106
    %108 = vadd.xlane.f32.xlu0 %v107
    %v109 = vpop.xlane.xlu0 %108
    %v110 = vrot.slane %v109, 4
    %v111 = vadd.f32 %v109, %v110
    %v112 = vrot.slane %v111, 2
    %v113 = vadd.f32 %v111, %v112
    %v114 = vrot.slane %v113, 1
    %v115 = vadd.f32 %v113, %v114
    %s116 = vtos %v115
    %v117 = vstv %s116
    %v118 = vadd.f32 %v104, %v117
    %119 = vst.msk [vmem:[#allocation6] sm:$0x1] %vm102, %v118
    // Predicated region
    $region18: #{body.6} parent=1 // pred_check
      _
    $region19: #{body.6} parent=1 // pred_check_branch
      %121 = sbr.rel (0) target = $region21
    $region20: #{body.6} parent=1 // pred_region
      %s123 = ssub.s32 16, 16
      %124 = vsyncadd [#allocation5], %s123
      %s126 = sshll.u32 [#allocation4], 4
      %s127 = int_to_ptr.vmem [resolvable:$true] %s126
      %129 = dma.vmem_to_hbm [thread:$0]  %s127, 16, %s3, [#allocation5]
    $region21: #{body.6} parent=1 // pred_fallthru
      _
    // Predicated region
    $region22: #{body.6} parent=1 // pred_check
      _
    $region23: #{body.6} parent=1 // pred_check_branch
      %131 = sbr.rel (0) target = $region25
    $region24: #{body.6} parent=1 // pred_region
      %s133 = ssub.s32 16, 16
      %134 = vsyncadd [#allocation7], %s133
      %s136 = sshll.u32 [#allocation6], 4
      %s137 = int_to_ptr.vmem [resolvable:$true] %s136
      %139 = dma.vmem_to_hbm [thread:$0]  %s137, 16, %s4, [#allocation7]
    $region25: #{body.6} parent=1 // pred_fallthru
      _
    // Predicated region
    $region26: #{body.6} parent=1 // pred_check
      _
    $region27: #{body.6} parent=1 // pred_check_branch
      %141 = sbr.rel (0) target = $region29
    $region28: #{body.6} parent=1 // pred_region
      %142 = dma.done [#allocation5], 16
    $region29: #{body.6} parent=1 // pred_fallthru
      _
    // Predicated region
    $region30: #{body.6} parent=1 // pred_check
      _
    $region31: #{body.6} parent=1 // pred_check_branch
      %144 = sbr.rel (0) target = $region33
    $region32: #{body.6} parent=1 // pred_region
      %145 = dma.done [#allocation7], 16
    $region33: #{body.6} parent=1 // pred_fallthru
      _
    %146 = vsyncpa [#allocation5], 1
    %147 = vsyncpa [#allocation7], 1

</llo_original>
